<compile_context>
chip_gen: v5e
topology: v5e:2x2
jax: 0.10.0
libtpu: 0.0.40
codegen_flags: <defaults>
</compile_context>

<pallas_src>
import functools

import jax
import jax.numpy as jnp
from jax.experimental import pallas as pl
from jax.experimental.pallas import tpu as pltpu


def _vmem_capacity_bytes():
    """Per-core VMEM capacity; conservative (v7x) fallback if the query is unavailable."""
    try:
        return int(pltpu.get_tpu_info().vmem_capacity_bytes)
    except Exception:
        return 64 << 20


def _pick_tile_rows(ho, wo, target_rows):
    """Largest divisor TH of ho with TH*wo <= target_rows (prefer TH*wo % 8 == 0)."""
    divisors = [d for d in range(ho, 0, -1) if ho % d == 0]
    for th in divisors:
        if th * wo <= target_rows and (th * wo) % 8 == 0:
            return th
    for th in divisors:
        if th * wo <= target_rows:
            return th
    return ho


def _pick_epilogue_chunk(p_img, cap=2048):
    """Largest divisor of p_img <= cap (>=128), else p_img (single-shot epilogue)."""
    if p_img <= cap:
        return p_img
    for c in range(cap, 127, -1):
        if p_img % c == 0:
            return c
    return p_img


def _unet_down_kernel(strip_ref, halo_ref, w_ref, o_ref, *scratch, eps, negative_slope,
                      normalize, fuse_taps, channel_major, th, wo, cout_block, p_img,
                      epi_chunk):
    if fuse_taps:
        acc_ref, sum_ref, ssq_ref, xcat_ref = scratch
    else:
        acc_ref, sum_ref, ssq_ref = scratch

    t = pl.program_id(2)
    n_strips = pl.num_programs(2)
    p_strip = th * wo
    c4 = strip_ref.shape[-1]                       # 4*Cin

    strip = strip_ref[0]                           # (th, Ws, 4*Cin)
    halo = halo_ref[0]                             # (1,  Ws, 4*Cin)  -- row just below the strip
    rows_dn = jnp.concatenate([strip[1:], halo], axis=0) if th > 1 else halo

    # Conv2d(k=4, s=2, p=1) == 2x2 stride-1 conv on the space-to-depth input.
    if fuse_taps:
        # Shallow layers: build the (p_strip, 16*Cin) im2col strip in VMEM scratch and
        # hit the MXU once with the full contraction depth (instead of 4 tiny-K taps).
        xcat_ref[:, 0 * c4:1 * c4] = strip[:, 0:wo, :].reshape(p_strip, c4)
        xcat_ref[:, 1 * c4:2 * c4] = strip[:, 1:wo + 1, :].reshape(p_strip, c4)
        xcat_ref[:, 2 * c4:3 * c4] = rows_dn[:, 0:wo, :].reshape(p_strip, c4)
        xcat_ref[:, 3 * c4:4 * c4] = rows_dn[:, 1:wo + 1, :].reshape(p_strip, c4)
        conv = jnp.dot(xcat_ref[...], w_ref[...], preferred_element_type=jnp.float32)
    else:
        # Deep layers (4*Cin already >= MXU depth): 4 shifted-window taps.
        top0 = strip[:, 0:wo, :].reshape(p_strip, c4)
        top1 = strip[:, 1:wo + 1, :].reshape(p_strip, c4)
        bot0 = rows_dn[:, 0:wo, :].reshape(p_strip, c4)
        bot1 = rows_dn[:, 1:wo + 1, :].reshape(p_strip, c4)
        conv = jnp.dot(top0, w_ref[0], preferred_element_type=jnp.float32)
        conv = conv + jnp.dot(top1, w_ref[1], preferred_element_type=jnp.float32)
        conv = conv + jnp.dot(bot0, w_ref[2], preferred_element_type=jnp.float32)
        conv = conv + jnp.dot(bot1, w_ref[3], preferred_element_type=jnp.float32)

    if normalize:
        # Streamed single-pass per-channel moments (exact per image / channel chunk).
        # TODO(synk): compensated / two-pass moments if |mean| >> std ever matters.
        @pl.when(t == 0)
        def _():
            sum_ref[...] = jnp.zeros_like(sum_ref)
            ssq_ref[...] = jnp.zeros_like(ssq_ref)

        sum_ref[...] += jnp.sum(conv, axis=0, keepdims=True)
        ssq_ref[...] += jnp.sum(conv * conv, axis=0, keepdims=True)

    # Stash this strip's conv result in the per-image accumulator.  For the channel-major
    # layout the transpose is done per strip (XLU work overlaps the MXU, no big epilogue).
    base = t * p_strip
    if channel_major:
        if p_strip % 128 == 0:
            base = pl.multiple_of(base, 128)
        acc_ref[:, pl.ds(base, p_strip)] = jnp.transpose(conv)
    else:
        if p_strip % 8 == 0:
            base = pl.multiple_of(base, 8)
        acc_ref[pl.ds(base, p_strip), :] = conv

    @pl.when(t == n_strips - 1)
    def _():
        if normalize:
            # InstanceNorm2d: biased variance, eps, no affine (torch defaults).
            inv_p = 1.0 / float(p_img)
            mean = sum_ref[...] * inv_p                               # (1, c_chunk)
            var = jnp.maximum(ssq_ref[...] * inv_p - mean * mean, 0.0)
            rstd = jax.lax.rsqrt(var + eps)
            if channel_major:
                mean_b = jnp.transpose(mean)                          # (c_chunk, 1)
                rstd_b = jnp.transpose(rstd)
            else:
                mean_b, rstd_b = mean, rstd                           # (1, c_chunk)

        def write_chunk(c0):
            if channel_major:
                if not isinstance(c0, int) and epi_chunk % 128 == 0:
                    c0 = pl.multiple_of(c0, 128)
                a = acc_ref[:, pl.ds(c0, epi_chunk)]                  # (c_chunk, epi)
                if normalize:
                    a = (a - mean_b) * rstd_b
                a = jnp.where(a >= 0, a, negative_slope * a)          # LeakyReLU(0.2)
                o_ref[0, :, pl.ds(c0, epi_chunk)] = a[:cout_block].astype(o_ref.dtype)
            else:
                if not isinstance(c0, int) and epi_chunk % 8 == 0:
                    c0 = pl.multiple_of(c0, 8)
                a = acc_ref[pl.ds(c0, epi_chunk), :]                  # (epi, c_chunk)
                if normalize:
                    a = (a - mean_b) * rstd_b
                a = jnp.where(a >= 0, a, negative_slope * a)
                o_ref[0, pl.ds(c0, epi_chunk), :] = a[:, :cout_block].astype(o_ref.dtype)

        n_chunks = p_img // epi_chunk
        if n_chunks == 1:
            write_chunk(0)
        else:
            # Chunked epilogue: bounds live ranges (64 vregs) and pipelines vld/VPU/vst.
            def body(ci, carry):
                write_chunk(ci * epi_chunk)
                return carry
            jax.lax.fori_loop(0, n_chunks, body, 0, unroll=bool(n_chunks <= 8))


def unet_down(x_nchw, conv_weight, *, normalize=True, eps=1e-5, negative_slope=0.2,
              matmul_dtype=jnp.bfloat16, fuse_taps=None, channel_chunk=None,
              tile_rows_target=None, epilogue_chunk=None):
    """UNetDown forward: Conv2d(4,2,1,bias=False) -> InstanceNorm2d -> LeakyReLU(0.2).

    x_nchw: (N, Cin, H, W); conv_weight: (Cout, Cin, 4, 4).  Returns (N, Cout, H//2, W//2).
    matmul_dtype defaults to bfloat16 (MXU operands; accumulation is f32); pass
    jnp.float32 for bit-tight numerics.
    """
    N, Cin, H, W = x_nchw.shape
    Cout = conv_weight.shape[0]
    assert conv_weight.shape == (Cout, Cin, 4, 4)
    assert H % 2 == 0 and W % 2 == 0
    Ho, Wo = H // 2, W // 2
    Hs, Ws = Ho + 1, Wo + 1                  # space-to-depth spatial dims (incl. padding)
    C4 = 4 * Cin
    K = 4 * C4                               # fused contraction depth (16*Cin)
    Cpad = ((Cout + 127) // 128) * 128
    P_img = Ho * Wo

    out_dtype = x_nchw.dtype
    mm_dtype = jnp.dtype(matmul_dtype) if matmul_dtype is not None else jnp.dtype(out_dtype)
    in_item = jnp.dtype(mm_dtype).itemsize
    out_item = jnp.dtype(out_dtype).itemsize

    if fuse_taps is None:
        fuse_taps = C4 < 256                 # fuse taps when 4*Cin is below the MXU depth
    channel_major = P_img >= 128             # lane-dense output layout choice

    vmem_cap = _vmem_capacity_bytes()
    vmem_budget = int(0.80 * vmem_cap)       # generation-aware (v6e ~102MiB, v7x ~51MiB)

    # ---- channel chunking (exact for InstanceNorm: statistics are per-channel) ----
    if channel_chunk is not None:
        assert channel_chunk % 128 == 0 and Cout % channel_chunk == 0
        c_chunk = channel_chunk
        NC = Cout // c_chunk
    elif Cout % 128 == 0:
        c_chunk = 128
        for c in range(Cout, 127, -128):
            if Cout % c == 0 and (P_img * c * 4 + 2 * P_img * c * out_item
                                  + 2 * K * c * in_item) <= vmem_budget // 2:
                c_chunk = c
                break
        NC = Cout // c_chunk
    else:
        c_chunk = Cpad                       # lane-pad; padding sliced off in the kernel
        NC = 1
    cout_block = Cout if NC == 1 else c_chunk

    # ---- row-strip size from the VMEM budget (acc / out / weights do not scale with TH) ----
    fixed_bytes = (P_img * c_chunk * 4                   # f32 per-image accumulator
                   + 2 * cout_block * P_img * out_item   # double-buffered output block
                   + 2 * K * c_chunk * in_item           # double-buffered (resident) weights
                   + 2 * Ws * C4 * in_item               # double-buffered halo row
                   + 4 * c_chunk * 4)                    # sum / sum-of-squares
    per_row = (2 * Ws * C4 * in_item                     # double-buffered strip rows
               + Wo * (K * in_item + 2 * c_chunk * 4))   # in-kernel im2col/conv temporaries
    avail = vmem_budget - fixed_bytes
    if avail < per_row:
        raise ValueError(
            "unet_down: per-image accumulator / output block do not fit the VMEM budget "
            f"(>= {fixed_bytes + per_row} B needed, {vmem_budget} B available). "
            "TODO(synk): per-strip output writeback + two-pass InstanceNorm fallback.")
    max_p_strip = (avail // per_row) * Wo
    target = tile_rows_target if tile_rows_target is not None else 4096
    TH = _pick_tile_rows(Ho, Wo, min(target, max_p_strip))
    S = Ho // TH

    epi_chunk = epilogue_chunk if epilogue_chunk is not None else _pick_epilogue_chunk(P_img)
    assert P_img % epi_chunk == 0

    # ---- glue: pure relayout (~1x input; no strip stack, no im2col in HBM) ----
    # NCHW -> NHWC -> zero-pad(1) -> space-to-depth(2); channel order (ri, rj, cin).
    x = jnp.transpose(x_nchw, (0, 2, 3, 1)).astype(mm_dtype)
    xp = jnp.pad(x, ((0, 0), (1, 1), (1, 1), (0, 0)))
    s2d = xp.reshape(N, Hs, 2, Ws, 2, Cin).transpose(0, 1, 3, 2, 4, 5).reshape(N, Hs, Ws, C4)

    # Conv weight -> taps (di,dj) of (4*Cin, Cout); contraction order (ri, rj, cin).
    w6 = conv_weight.reshape(Cout, Cin, 2, 2, 2, 2)                 # (co, ci, di, ri, dj, rj)
    w_taps = jnp.transpose(w6, (2, 4, 3, 5, 1, 0)).reshape(4, C4, Cout).astype(mm_dtype)
    if NC == 1 and Cpad != Cout:
        w_taps = jnp.pad(w_taps, ((0, 0), (0, 0), (0, Cpad - Cout)))
    w_arg = w_taps.reshape(K, -1) if fuse_taps else w_taps          # (16Cin,Cpad) or (4,4Cin,Cpad)

    # ---- specs ----
    in_specs = [
        # non-overlapping row strips of the space-to-depth input
        pl.BlockSpec((1, TH, Ws, C4), lambda n, c, t: (n, t, 0, 0)),
        # 1-row halo: the s2d row just below the strip (same array, second BlockSpec)
        pl.BlockSpec((1, 1, Ws, C4), lambda n, c, t: (n, (t + 1) * TH, 0, 0)),
    ]
    if fuse_taps:
        in_specs.append(pl.BlockSpec((K, c_chunk), lambda n, c, t: (0, c)))
    else:
        in_specs.append(pl.BlockSpec((4, C4, c_chunk), lambda n, c, t: (0, 0, c)))

    if channel_major:
        out_shape = jax.ShapeDtypeStruct((N, Cout, P_img), out_dtype)
        out_spec = pl.BlockSpec((1, cout_block, P_img), lambda n, c, t: (n, c, 0))
        acc_shape = (c_chunk, P_img)
    else:
        out_shape = jax.ShapeDtypeStruct((N, P_img, Cout), out_dtype)
        out_spec = pl.BlockSpec((1, P_img, cout_block), lambda n, c, t: (n, 0, c))
        acc_shape = (P_img, c_chunk)

    scratch = [pltpu.VMEM(acc_shape, jnp.float32),    # per-image conv accumulator
               pltpu.VMEM((1, c_chunk), jnp.float32),  # per-channel sum
               pltpu.VMEM((1, c_chunk), jnp.float32)]  # per-channel sum of squares
    if fuse_taps:
        scratch.append(pltpu.VMEM((TH * Wo, K), mm_dtype))  # in-VMEM im2col strip

    footprint = fixed_bytes + TH * per_row
    vmem_limit = int(min(max(int(1.4 * footprint) + (4 << 20), 32 << 20),
                         int(0.90 * vmem_cap)))

    cost = pl.CostEstimate(
        flops=int(2 * N * P_img * K * Cout),
        transcendentals=int(N * Cpad),
        bytes_accessed=int(NC * s2d.size * in_item + w_arg.size * in_item
                           + N * Cout * P_img * out_item))

    kernel = functools.partial(
        _unet_down_kernel, eps=float(eps), negative_slope=float(negative_slope),
        normalize=bool(normalize), fuse_taps=bool(fuse_taps),
        channel_major=bool(channel_major), th=TH, wo=Wo, cout_block=cout_block,
        p_img=P_img, epi_chunk=epi_chunk)

    out = pl.pallas_call(
        kernel,
        out_shape=out_shape,
        grid_spec=pltpu.PrefetchScalarGridSpec(
            num_scalar_prefetch=0,
            grid=(N, NC, S),
            in_specs=in_specs,
            out_specs=out_spec,
            scratch_shapes=scratch),
        compiler_params=pltpu.CompilerParams(
            dimension_semantics=("parallel", "parallel", "arbitrary"),
            vmem_limit_bytes=vmem_limit),
        cost_estimate=cost,
    )(s2d, s2d, w_arg)

    if channel_major:
        # metadata-only reshape: (N, Cout, Ho*Wo) -> NCHW
        return out.reshape(N, Cout, Ho, Wo)
    # tiny deep-layer maps (P_img < 128): spatial-major output, cheap wrapper transpose
    return jnp.transpose(out.reshape(N, Ho, Wo, Cout), (0, 3, 1, 2))


def _reference(x, w, normalize=True, eps=1e-5, slope=0.2):
    conv = jax.lax.conv_general_dilated(
        x, w, window_strides=(2, 2), padding=((1, 1), (1, 1)),
        dimension_numbers=("NCHW", "OIHW", "NCHW"))
    y = conv
    if normalize:
        mean = conv.mean(axis=(2, 3), keepdims=True)
        var = conv.var(axis=(2, 3), keepdims=True)
        y = (conv - mean) / jnp.sqrt(var + eps)
    return jnp.where(y >= 0, y, slope * y)


if __name__ == "__main__":
    keys = jax.random.split(jax.random.PRNGKey(0), 8)

    def check(name, y, ref, tol):
        assert y.shape == ref.shape, (name, y.shape, ref.shape)
        err = float(jnp.max(jnp.abs(y - ref)))
        assert err <= tol, f"{name}: max |err| = {err} > {tol}"

    # 1) base block: N=2, Cin=4, 16x16 -> Cout=8 (spatial-major output, fused taps)
    x1 = jax.random.normal(keys[0], (2, 4, 16, 16), dtype=jnp.float32)
    w1 = 0.05 * jax.random.normal(keys[1], (8, 4, 4, 4), dtype=jnp.float32)
    ref1 = _reference(x1, w1, normalize=True)
    y = jax.block_until_ready(unet_down(x1, w1, matmul_dtype=jnp.float32))
    check("base", y, ref1, 1e-4)

    # 2) multi-strip tiling (exercises halo BlockSpec + streamed InstanceNorm moments)
    y = jax.block_until_ready(unet_down(x1, w1, matmul_dtype=jnp.float32, tile_rows_target=16))
    check("multi-strip", y, ref1, 1e-4)

    # 3) normalize=False path (first UNetDown block of the GAN)
    ref3 = _reference(x1, w1, normalize=False)
    y = jax.block_until_ready(unet_down(x1, w1, normalize=False, matmul_dtype=jnp.float32))
    check("no-norm", y, ref3, 1e-4)

    # 4) channel-major output (P_img >= 128): per-strip transpose + chunked epilogue
    x4 = jax.random.normal(keys[2], (2, 4, 32, 32), dtype=jnp.float32)
    w4 = 0.05 * jax.random.normal(keys[3], (8, 4, 4, 4), dtype=jnp.float32)
    ref4 = _reference(x4, w4, normalize=True)
    y = jax.block_until_ready(unet_down(x4, w4, matmul_dtype=jnp.float32,
                                        tile_rows_target=128, epilogue_chunk=128))
    check("channel-major", y, ref4, 1e-4)

    # 5) channel-split parallel grid axis (Cout multiple of 128 split into 128-lane chunks)
    x5 = jax.random.normal(keys[4], (2, 8, 16, 16), dtype=jnp.float32)
    w5 = 0.05 * jax.random.normal(keys[5], (256, 8, 4, 4), dtype=jnp.float32)
    ref5 = _reference(x5, w5, normalize=True)
    y = jax.block_until_ready(unet_down(x5, w5, matmul_dtype=jnp.float32, channel_chunk=128))
    check("channel-split", y, ref5, 1e-4)

    # 6) un-fused 4-tap path (used automatically when 4*Cin >= MXU depth)
    y = jax.block_until_ready(unet_down(x1, w1, matmul_dtype=jnp.float32, fuse_taps=False))
    check("four-tap", y, ref1, 1e-4)

    # 7) default bf16 MXU operands (f32 accumulation) -- looser tolerance by construction
    y = jax.block_until_ready(unet_down(x1, w1))
    check("bf16", y, ref1, 1e-1)

    print("KERNEL_OK")
</pallas_src>

<mosaic_0001>
module attributes {stable_mosaic.version = 11 : i64} {
  func.func @_unet_down_kernel(%arg0: i32, %arg1: i32, %arg2: i32, %arg3: memref<1x8x9x16xf32, #tpu.memory_space<vmem>>, %arg4: memref<1x1x9x16xf32, #tpu.memory_space<vmem>>, %arg5: memref<64x128xf32, #tpu.memory_space<vmem>>, %arg6: memref<1x64x8xf32, #tpu.memory_space<vmem>>, %arg7: memref<64x128xf32, #tpu.memory_space<vmem>>, %arg8: memref<1x128xf32, #tpu.memory_space<vmem>>, %arg9: memref<1x128xf32, #tpu.memory_space<vmem>>, %arg10: memref<64x64xf32, #tpu.memory_space<vmem>>) attributes {dimension_semantics = [#tpu.dimension_semantics<parallel>, #tpu.dimension_semantics<parallel>, #tpu.dimension_semantics<arbitrary>], iteration_bounds = array<i64: 2, 1, 1>, scalar_prefetch = 0 : i64, scratch_operands = 4 : i64, tpu.core_type = #tpu.core_type<tc>, window_params = [{transform_indices = @transform_0, window_bounds = array<i64: 1, 8, 9, 16>}, {transform_indices = @transform_1, window_bounds = array<i64: 1, 1, 9, 16>}, {transform_indices = @transform_2, window_bounds = array<i64: 64, 128>}, {transform_indices = @transform_3, window_bounds = array<i64: 1, 64, 8>}]} {
    %c0 = arith.constant 0 : index
    %c0_0 = arith.constant 0 : index
    %c0_1 = arith.constant 0 : index
    %c0_2 = arith.constant 0 : index
    %0 = vector.load %arg3[%c0, %c0_0, %c0_1, %c0_2] : memref<1x8x9x16xf32, #tpu.memory_space<vmem>>, vector<1x8x9x16xf32>
    %1 = vector.shape_cast %0 : vector<1x8x9x16xf32> to vector<8x9x16xf32>
    %c0_3 = arith.constant 0 : index
    %c0_4 = arith.constant 0 : index
    %c0_5 = arith.constant 0 : index
    %c0_6 = arith.constant 0 : index
    %2 = vector.load %arg4[%c0_3, %c0_4, %c0_5, %c0_6] : memref<1x1x9x16xf32, #tpu.memory_space<vmem>>, vector<1x1x9x16xf32>
    %3 = vector.shape_cast %2 : vector<1x1x9x16xf32> to vector<1x9x16xf32>
    %4 = vector.extract_strided_slice %1 {offsets = [1, 0, 0], sizes = [7, 9, 16], strides = [1, 1, 1]} : vector<8x9x16xf32> to vector<7x9x16xf32>
    %5 = tpu.concatenate %4, %3 in 0 : vector<7x9x16xf32>, vector<1x9x16xf32> -> vector<8x9x16xf32>
    %6 = vector.extract_strided_slice %1 {offsets = [0, 0, 0], sizes = [8, 8, 16], strides = [1, 1, 1]} : vector<8x9x16xf32> to vector<8x8x16xf32>
    %7 = vector.shape_cast %6 : vector<8x8x16xf32> to vector<64x16xf32>
    %c0_7 = arith.constant 0 : index
    %c0_8 = arith.constant 0 : index
    %8 = vector.load %arg10[%c0_7, %c0_8] : memref<64x64xf32, #tpu.memory_space<vmem>>, vector<64x16xf32>
    tpu.vector_store %arg10[%c0_7, %c0_8], %7 {strides = array<i32>} : memref<64x64xf32, #tpu.memory_space<vmem>>, vector<64x16xf32>,
    %9 = vector.extract_strided_slice %1 {offsets = [0, 1, 0], sizes = [8, 8, 16], strides = [1, 1, 1]} : vector<8x9x16xf32> to vector<8x8x16xf32>
    %10 = vector.shape_cast %9 : vector<8x8x16xf32> to vector<64x16xf32>
    %c0_9 = arith.constant 0 : index
    %c16 = arith.constant 16 : index
    %11 = vector.load %arg10[%c0_9, %c16] : memref<64x64xf32, #tpu.memory_space<vmem>>, vector<64x16xf32>
    tpu.vector_store %arg10[%c0_9, %c16], %10 {strides = array<i32>} : memref<64x64xf32, #tpu.memory_space<vmem>>, vector<64x16xf32>,
    %12 = vector.extract_strided_slice %5 {offsets = [0, 0, 0], sizes = [8, 8, 16], strides = [1, 1, 1]} : vector<8x9x16xf32> to vector<8x8x16xf32>
    %13 = vector.shape_cast %12 : vector<8x8x16xf32> to vector<64x16xf32>
    %c0_10 = arith.constant 0 : index
    %c32 = arith.constant 32 : index
    %14 = vector.load %arg10[%c0_10, %c32] : memref<64x64xf32, #tpu.memory_space<vmem>>, vector<64x16xf32>
    tpu.vector_store %arg10[%c0_10, %c32], %13 {strides = array<i32>} : memref<64x64xf32, #tpu.memory_space<vmem>>, vector<64x16xf32>,
    %15 = vector.extract_strided_slice %5 {offsets = [0, 1, 0], sizes = [8, 8, 16], strides = [1, 1, 1]} : vector<8x9x16xf32> to vector<8x8x16xf32>
    %16 = vector.shape_cast %15 : vector<8x8x16xf32> to vector<64x16xf32>
    %c0_11 = arith.constant 0 : index
    %c48 = arith.constant 48 : index
    %17 = vector.load %arg10[%c0_11, %c48] : memref<64x64xf32, #tpu.memory_space<vmem>>, vector<64x16xf32>
    tpu.vector_store %arg10[%c0_11, %c48], %16 {strides = array<i32>} : memref<64x64xf32, #tpu.memory_space<vmem>>, vector<64x16xf32>,
    %c0_12 = arith.constant 0 : index
    %c0_13 = arith.constant 0 : index
    %18 = vector.load %arg10[%c0_12, %c0_13] : memref<64x64xf32, #tpu.memory_space<vmem>>, vector<64x64xf32>
    %c0_14 = arith.constant 0 : index
    %c0_15 = arith.constant 0 : index
    %19 = vector.load %arg5[%c0_14, %c0_15] : memref<64x128xf32, #tpu.memory_space<vmem>>, vector<64x128xf32>
    %cst = arith.constant dense<0.000000e+00> : vector<64x128xf32>
    %20 = tpu.matmul %18, %19, %cst {dimension_numbers = #tpu.dot_dimension_numbers<[1], [0], [0], [1], [0, 0, 1, 1], [], []>} : vector<64x64xf32>, vector<64x128xf32>, vector<64x128xf32> -> vector<64x128xf32>
    %c0_i32 = arith.constant 0 : i32
    %21 = arith.cmpi eq, %arg2, %c0_i32 : i32
    %22 = arith.extui %21 : i1 to i32
    %c0_i32_16 = arith.constant 0 : i32
    %23 = arith.cmpi ne, %22, %c0_i32_16 : i32
    scf.if %23 {
      %cst_30 = arith.constant 0.000000e+00 : f32
      %42 = vector.broadcast %cst_30 : f32 to vector<1x128xf32>
      %c0_31 = arith.constant 0 : index
      %c0_32 = arith.constant 0 : index
      %43 = vector.load %arg8[%c0_31, %c0_32] : memref<1x128xf32, #tpu.memory_space<vmem>>, vector<1x128xf32>
      tpu.vector_store %arg8[%c0_31, %c0_32], %42 {strides = array<i32>} : memref<1x128xf32, #tpu.memory_space<vmem>>, vector<1x128xf32>,
      %cst_33 = arith.constant 0.000000e+00 : f32
      %44 = vector.broadcast %cst_33 : f32 to vector<1x128xf32>
      %c0_34 = arith.constant 0 : index
      %c0_35 = arith.constant 0 : index
      %45 = vector.load %arg9[%c0_34, %c0_35] : memref<1x128xf32, #tpu.memory_space<vmem>>, vector<1x128xf32>
      tpu.vector_store %arg9[%c0_34, %c0_35], %44 {strides = array<i32>} : memref<1x128xf32, #tpu.memory_space<vmem>>, vector<1x128xf32>,
    } else {
    }
    %c0_17 = arith.constant 0 : index
    %c0_18 = arith.constant 0 : index
    %24 = vector.load %arg8[%c0_17, %c0_18] : memref<1x128xf32, #tpu.memory_space<vmem>>, vector<1x128xf32>
    %cst_19 = arith.constant dense<0.000000e+00> : vector<128xf32>
    %25 = vector.multi_reduction <add>, %20, %cst_19 [0] : vector<64x128xf32> to vector<128xf32>
    %26 = vector.shape_cast %25 : vector<128xf32> to vector<1x128xf32>
    %27 = arith.addf %24, %26 : vector<1x128xf32>
    %c0_20 = arith.constant 0 : index
    %c0_21 = arith.constant 0 : index
    %28 = vector.load %arg8[%c0_20, %c0_21] : memref<1x128xf32, #tpu.memory_space<vmem>>, vector<1x128xf32>
    tpu.vector_store %arg8[%c0_20, %c0_21], %27 {strides = array<i32>} : memref<1x128xf32, #tpu.memory_space<vmem>>, vector<1x128xf32>,
    %c0_22 = arith.constant 0 : index
    %c0_23 = arith.constant 0 : index
    %29 = vector.load %arg9[%c0_22, %c0_23] : memref<1x128xf32, #tpu.memory_space<vmem>>, vector<1x128xf32>
    %30 = arith.mulf %20, %20 : vector<64x128xf32>
    %cst_24 = arith.constant dense<0.000000e+00> : vector<128xf32>
    %31 = vector.multi_reduction <add>, %30, %cst_24 [0] : vector<64x128xf32> to vector<128xf32>
    %32 = vector.shape_cast %31 : vector<128xf32> to vector<1x128xf32>
    %33 = arith.addf %29, %32 : vector<1x128xf32>
    %c0_25 = arith.constant 0 : index
    %c0_26 = arith.constant 0 : index
    %34 = vector.load %arg9[%c0_25, %c0_26] : memref<1x128xf32, #tpu.memory_space<vmem>>, vector<1x128xf32>
    tpu.vector_store %arg9[%c0_25, %c0_26], %33 {strides = array<i32>} : memref<1x128xf32, #tpu.memory_space<vmem>>, vector<1x128xf32>,
    %c64_i32 = arith.constant 64 : i32
    %35 = arith.muli %arg2, %c64_i32 : i32
    %36 = tpu.assume_multiple %35, 8 : i32
    %37 = arith.index_cast %36 : i32 to index
    %c0_27 = arith.constant 0 : index
    %38 = vector.load %arg7[%37, %c0_27] : memref<64x128xf32, #tpu.memory_space<vmem>>, vector<64x128xf32>
    tpu.vector_store %arg7[%37, %c0_27], %20 {strides = array<i32>} : memref<64x128xf32, #tpu.memory_space<vmem>>, vector<64x128xf32>,
    %c0_i32_28 = arith.constant 0 : i32
    %39 = arith.cmpi eq, %arg2, %c0_i32_28 : i32
    %40 = arith.extui %39 : i1 to i32
    %c0_i32_29 = arith.constant 0 : i32
    %41 = arith.cmpi ne, %40, %c0_i32_29 : i32
    scf.if %41 {
      %c0_30 = arith.constant 0 : index
      %c0_31 = arith.constant 0 : index
      %42 = vector.load %arg8[%c0_30, %c0_31] : memref<1x128xf32, #tpu.memory_space<vmem>>, vector<1x128xf32>
      %cst_32 = arith.constant 1.562500e-02 : f32
      %43 = vector.broadcast %cst_32 : f32 to vector<1x128xf32>
      %44 = arith.mulf %42, %43 : vector<1x128xf32>
      %c0_33 = arith.constant 0 : index
      %c0_34 = arith.constant 0 : index
      %45 = vector.load %arg9[%c0_33, %c0_34] : memref<1x128xf32, #tpu.memory_space<vmem>>, vector<1x128xf32>
      %cst_35 = arith.constant 1.562500e-02 : f32
      %46 = vector.broadcast %cst_35 : f32 to vector<1x128xf32>
      %47 = arith.mulf %45, %46 : vector<1x128xf32>
      %48 = arith.mulf %44, %44 : vector<1x128xf32>
      %49 = arith.subf %47, %48 : vector<1x128xf32>
      %cst_36 = arith.constant 0.000000e+00 : f32
      %50 = vector.broadcast %cst_36 : f32 to vector<1x128xf32>
      %51 = arith.maximumf %49, %50 : vector<1x128xf32>
      %cst_37 = arith.constant 9.99999974E-6 : f32
      %52 = vector.broadcast %cst_37 : f32 to vector<1x128xf32>
      %53 = arith.addf %51, %52 : vector<1x128xf32>
      %54 = math.rsqrt %53 : vector<1x128xf32>
      %c0_38 = arith.constant 0 : index
      %c0_39 = arith.constant 0 : index
      %55 = vector.load %arg7[%c0_38, %c0_39] : memref<64x128xf32, #tpu.memory_space<vmem>>, vector<64x128xf32>
      %56 = vector.broadcast %44 : vector<1x128xf32> to vector<64x128xf32>
      %57 = arith.subf %55, %56 : vector<64x128xf32>
      %58 = vector.broadcast %54 : vector<1x128xf32> to vector<64x128xf32>
      %59 = arith.mulf %57, %58 : vector<64x128xf32>
      %cst_40 = arith.constant 0.000000e+00 : f32
      %60 = vector.broadcast %cst_40 : f32 to vector<64x128xf32>
      %61 = arith.cmpf oge, %59, %60 : vector<64x128xf32>
      %cst_41 = arith.constant 2.000000e-01 : f32
      %62 = vector.broadcast %cst_41 : f32 to vector<64x128xf32>
      %63 = arith.mulf %62, %59 : vector<64x128xf32>
      %64 = arith.select %61, %59, %63 : vector<64x128xi1>, vector<64x128xf32>
      %65 = vector.extract_strided_slice %64 {offsets = [0, 0], sizes = [64, 8], strides = [1, 1]} : vector<64x128xf32> to vector<64x8xf32>
      %c0_42 = arith.constant 0 : index
      %c0_43 = arith.constant 0 : index
      %c0_44 = arith.constant 0 : index
      %66 = vector.load %arg6[%c0_42, %c0_43, %c0_44] : memref<1x64x8xf32, #tpu.memory_space<vmem>>, vector<1x64x8xf32>
      %67 = vector.shape_cast %66 : vector<1x64x8xf32> to vector<64x8xf32>
      %68 = vector.shape_cast %65 : vector<64x8xf32> to vector<1x64x8xf32>
      tpu.vector_store %arg6[%c0_42, %c0_43, %c0_44], %68 {strides = array<i32>} : memref<1x64x8xf32, #tpu.memory_space<vmem>>, vector<1x64x8xf32>,
    } else {
    }
    return
  }
  func.func @transform_0(%arg0: i32, %arg1: i32, %arg2: i32) -> (i32, i32, i32, i32) {
    %c0_i32 = arith.constant 0 : i32
    %c0_i32_0 = arith.constant 0 : i32
    %c0_i32_1 = arith.constant 0 : i32
    return %arg0, %arg2, %c0_i32, %c0_i32_0 : i32, i32, i32, i32
  }
  func.func @transform_1(%arg0: i32, %arg1: i32, %arg2: i32) -> (i32, i32, i32, i32) {
    %c1_i32 = arith.constant 1 : i32
    %0 = arith.addi %arg2, %c1_i32 : i32
    %c8_i32 = arith.constant 8 : i32
    %1 = arith.muli %0, %c8_i32 : i32
    %c0_i32 = arith.constant 0 : i32
    %c0_i32_0 = arith.constant 0 : i32
    %c0_i32_1 = arith.constant 0 : i32
    return %arg0, %1, %c0_i32, %c0_i32_0 : i32, i32, i32, i32
  }
  func.func @transform_2(%arg0: i32, %arg1: i32, %arg2: i32) -> (i32, i32) {
    %c0_i32 = arith.constant 0 : i32
    %c0_i32_0 = arith.constant 0 : i32
    return %c0_i32, %arg1 : i32, i32
  }
  func.func @transform_3(%arg0: i32, %arg1: i32, %arg2: i32) -> (i32, i32, i32) {
    %c0_i32 = arith.constant 0 : i32
    %c0_i32_0 = arith.constant 0 : i32
    return %arg0, %c0_i32, %arg1 : i32, i32, i32
  }
}

</mosaic_0001>

<llo_original>
// kernel: tpu_custom_call.1
$region0: #{tpu_custom_call.1}
  #allocation0 [shape = 'u32[]', space=smem, size = 0x4, offset = 0x4, fixed_abs, tag = 'smem constant byte address 0x4 - core index']
  #allocation1 [shape = 'u32[72,128]{1,0:T(1,128)}', space=vmem, size = 0x9000, scoped, tag = 'internal scratch']
  #allocation2 [shape = 'f32[64,128]{1,0:T(8,128)}', space=vmem, size = 0x8000, scoped, tag = 'scratch operand']
  #allocation3 [shape = 'f32[1,128]{1,0:T(1,128)}', space=vmem, size = 0x200, scoped, tag = 'scratch operand']
  #allocation4 [shape = 'f32[1,128]{1,0:T(1,128)}', space=vmem, size = 0x200, scoped, tag = 'scratch operand']
  #allocation5 [shape = 'f32[64,64]{1,0:T(8,128)}', space=vmem, size = 0x8000, scoped, tag = 'scratch operand']
  %s0 = inlined_call_operand.vmem [shape: f32[2,9,9,16], index: 0, kind: input, shape index: {}]
  %s1 = inlined_call_operand.vmem [shape: f32[2,9,9,16], index: 1, kind: input, shape index: {}]
  %s2 = inlined_call_operand.vmem [shape: f32[64,128], index: 2, kind: input, shape index: {}]
  %s3 = inlined_call_operand.vmem [shape: f32[2,64,8], index: 3, kind: output, shape index: {}]
  %s4 = sld [smem:[#allocation0]]
  $region53: #{tpu_custom_call.1} parent=0
    _
  %s6 = ssub.s32 1, %s4
  %s7 = scalar_select 0, %s6, %s4
  loop: start=0, step=1, limit=4
  $region2: #{tpu_custom_call.1} parent=0 // loop_pre_header
    _
  $region3: #{tpu_custom_call.1} parent=0 // loop_header
    %s9 = sphi 0, %s13
    %p10 = scmp.ge.s32.totalorder %s9, 4
    %s16 = sphi 0, %s35
    %s17 = sphi 0, %s31
    %s18 = sphi 0, %s27
    %s19 = sphi 0, %s16
    %s20 = sphi 0, %s17
    %s21 = sphi 0, %s18
    %s22 = sphi 0, %s19
    %s23 = sphi 0, %s20
    %s24 = sphi 0, %s21
    %s40 = sphi 0, %s42
    %s43 = sphi 0, %s40
    %s44 = sphi 0, %s43
    %s60 = sphi 0, %s44
    %s72 = sphi 0, %s74
    %s75 = sphi 0, %s72
    %s76 = sphi 0, %s75
    %s92 = sphi 0, %s76
    %s98 = sphi 0, %s100
    %s101 = sphi 0, %s98
    %s102 = sphi 0, %s101
    %s118 = sphi 0, %s102
    %s126 = sphi 0, %s128
    %s129 = sphi 0, %s126
    %s130 = sphi 0, %s129
    %s146 = sphi 0, %s130
  $region4: #{tpu_custom_call.1} parent=0 // loop_header_branch
    %12 = sbr.rel (%p10) target = $region8
  $region5: #{tpu_custom_call.1} parent=0 // loop_body
    %s14 = ssub.s32 %s9, 1
    %s15 = ssub.s32 %s9, 2
    %s25 = sadd.s32 1, %s18
    %p26 = scmp.ge.s32.totalorder %s25, 1
    %s27 = scalar_select %p26, 0, %s25
    %s28 = sadd.s32 1, %s17
    %s29 = scalar_select %p26, %s28, %s17
    %p30 = scmp.ge.s32.totalorder %s29, 1
    %s31 = scalar_select %p30, 0, %s29
    %s32 = sadd.s32 1, %s16
    %s33 = scalar_select %p30, %s32, %s16
    %p34 = scmp.ge.s32.totalorder %s33, 2
    %s35 = scalar_select %p34, 0, %s33
    %s36 = ssub.s32 %s16, %s35
    %s37 = ssub.s32 %s18, %s27
    %s38 = sor.u32 %s36, %s37
    %p39 = scmp.eq.s32.totalorder %s38, 0
    %s41 = sadd.s32 %s40, 1
    %s42 = scalar_select %p39, %s40, %s41
    %p45 = pneg %p39
    %p46 = scmp.eq.s32.totalorder %s9, 1
    %p47 = por %p45, %p46
    %p48 = scmp.ne.s32.totalorder %s40, %s43
    %p49 = scmp.eq.s32.totalorder %s9, 0
    %p50 = por %p48, %p49
    %p51 = scmp.ne.s32.totalorder %s40, %s43
    %p52 = scmp.eq.s32.totalorder %s14, 1
    %p53 = por %p51, %p52
    %p54 = scmp.ne.s32.totalorder %s43, %s44
    %p55 = scmp.eq.s32.totalorder %s14, 0
    %p56 = por %p54, %p55
    %p57 = scmp.ne.s32.totalorder %s43, %s44
    %p58 = scmp.eq.s32.totalorder %s15, 1
    %p59 = por %p57, %p58
    %p61 = scmp.ne.s32.totalorder %s44, %s60
    %p62 = scmp.eq.s32.totalorder %s15, 0
    %p63 = por %p61, %p62
    %s64 = sadd.s32 %s18, 1
    %s65 = smul.u32 %s64, 8
    %s66 = sadd.s32 %s27, 1
    %s67 = smul.u32 %s66, 8
    %s68 = ssub.s32 %s16, %s35
    %s69 = ssub.s32 %s65, %s67
    %s70 = sor.u32 %s68, %s69
    %p71 = scmp.eq.s32.totalorder %s70, 0
    %s73 = sadd.s32 %s72, 1
    %s74 = scalar_select %p71, %s72, %s73
    %p77 = pneg %p71
    %p78 = scmp.eq.s32.totalorder %s9, 1
    %p79 = por %p77, %p78
    %p80 = scmp.ne.s32.totalorder %s72, %s75
    %p81 = scmp.eq.s32.totalorder %s9, 0
    %p82 = por %p80, %p81
    %p83 = scmp.ne.s32.totalorder %s72, %s75
    %p84 = scmp.eq.s32.totalorder %s14, 1
    %p85 = por %p83, %p84
    %p86 = scmp.ne.s32.totalorder %s75, %s76
    %p87 = scmp.eq.s32.totalorder %s14, 0
    %p88 = por %p86, %p87
    %p89 = scmp.ne.s32.totalorder %s75, %s76
    %p90 = scmp.eq.s32.totalorder %s15, 1
    %p91 = por %p89, %p90
    %p93 = scmp.ne.s32.totalorder %s76, %s92
    %p94 = scmp.eq.s32.totalorder %s15, 0
    %p95 = por %p93, %p94
    %s96 = ssub.s32 %s17, %s31
    %p97 = scmp.eq.s32.totalorder %s96, 0
    %s99 = sadd.s32 %s98, 1
    %s100 = scalar_select %p97, %s98, %s99
    %p103 = pneg %p97
    %p104 = scmp.eq.s32.totalorder %s9, 1
    %p105 = por %p103, %p104
    %p106 = scmp.ne.s32.totalorder %s98, %s101
    %p107 = scmp.eq.s32.totalorder %s9, 0
    %p108 = por %p106, %p107
    %p109 = scmp.ne.s32.totalorder %s98, %s101
    %p110 = scmp.eq.s32.totalorder %s14, 1
    %p111 = por %p109, %p110
    %p112 = scmp.ne.s32.totalorder %s101, %s102
    %p113 = scmp.eq.s32.totalorder %s14, 0
    %p114 = por %p112, %p113
    %p115 = scmp.ne.s32.totalorder %s101, %s102
    %p116 = scmp.eq.s32.totalorder %s15, 1
    %p117 = por %p115, %p116
    %p119 = scmp.ne.s32.totalorder %s102, %s118
    %p120 = scmp.eq.s32.totalorder %s15, 0
    %p121 = por %p119, %p120
    %s122 = ssub.s32 %s16, %s35
    %s123 = ssub.s32 %s17, %s31
    %s124 = sor.u32 %s122, %s123
    %p125 = scmp.eq.s32.totalorder %s124, 0
    %s127 = sadd.s32 %s126, 1
    %s128 = scalar_select %p125, %s126, %s127
    %p131 = pneg %p125
    %p132 = scmp.eq.s32.totalorder %s9, 1
    %p133 = por %p131, %p132
    %p134 = scmp.ne.s32.totalorder %s126, %s129
    %p135 = scmp.eq.s32.totalorder %s9, 0
    %p136 = por %p134, %p135
    %p137 = scmp.ne.s32.totalorder %s126, %s129
    %p138 = scmp.eq.s32.totalorder %s14, 1
    %p139 = por %p137, %p138
    %p140 = scmp.ne.s32.totalorder %s129, %s130
    %p141 = scmp.eq.s32.totalorder %s14, 0
    %p142 = por %p140, %p141
    %p143 = scmp.ne.s32.totalorder %s129, %s130
    %p144 = scmp.eq.s32.totalorder %s15, 1
    %p145 = por %p143, %p144
    %p147 = scmp.ne.s32.totalorder %s130, %s146
    %p148 = scmp.eq.s32.totalorder %s15, 0
    %p149 = por %p147, %p148
    %p150 = scmp.le.s32.totalorder 1, %s9
    %p151 = scmp.lt.s32.totalorder %s9, 3
    %p152 = pnand %p150, %p151
    %p153 = pneg %p152
    // Predicated region
    $region9: #{tpu_custom_call.1} parent=5 // pred_check
      _
    $region10: #{tpu_custom_call.1} parent=5 // pred_check_branch
      %155 = sbr.rel (%p152) target = $region12
    $region11: #{tpu_custom_call.1} parent=5 // pred_region
      %s156 = ssub.s32 %s9, 1
      // Predicated region
      $region13: #{tpu_custom_call.1} parent=11 // pred_check
        %p157 = pneg %p114
      $region14: #{tpu_custom_call.1} parent=11 // pred_check_branch
        %159 = sbr.rel (%p157) target = $region16
      $region15: #{tpu_custom_call.1} parent=11 // pred_region
        %p160 = scmp.lt.s32.totalorder %s20, 0
        %s161 = scalar_select %p160, %s20, 0
        %s162 = smul.addr %s161, 8
        %s163 = scalar_lea.vmem %s2, %s162
      $region16: #{tpu_custom_call.1} parent=11 // pred_fallthru
        _
    $region12: #{tpu_custom_call.1} parent=5 // pred_fallthru
      _
    %p164 = scmp.lt.s32.totalorder %s9, 2
    // Predicated region
    $region17: #{tpu_custom_call.1} parent=5 // pred_check
      %p165 = pneg %p164
    $region18: #{tpu_custom_call.1} parent=5 // pred_check_branch
      %167 = sbr.rel (%p165) target = $region20
    $region19: #{tpu_custom_call.1} parent=5 // pred_region
      // Predicated region
      $region21: #{tpu_custom_call.1} parent=19 // pred_check
        %p168 = pneg %p50
      $region22: #{tpu_custom_call.1} parent=19 // pred_check_branch
        %170 = sbr.rel (%p168) target = $region24
      $region23: #{tpu_custom_call.1} parent=19 // pred_region
        %s171 = smul.u32 8, %s18
        %s172 = ssub.s32 9, %s171
        %p173 = scmp.lt.s32.totalorder %s172, 8
        %s174 = scalar_select %p173, %s172, 8
        %s175 = smul.u32 8, %s174
        %s176 = smul.u32 %s175, 2
        %p177 = scmp.lt.s32.totalorder %s16, 1
        %s178 = scalar_select %p177, %s16, 1
        %p179 = scmp.lt.s32.totalorder %s171, 8
        %s180 = scalar_select %p179, %s171, 8
        %s181 = smul.addr %s180, 2
        %s182 = smul.addr %s178, 18
        %s183 = sadd.s32 %s181, %s182
        %s184 = smul.addr %s183, 8
        %s185 = scalar_lea.vmem %s0, %s184
        %s186 = smul.u32 8, %s18
        %s187 = ssub.s32 9, %s186
        %p188 = scmp.lt.s32.totalorder %s187, 8
        %s189 = scalar_select %p188, %s187, 8
        %s190 = smul.u32 8, %s189
        %s191 = smul.u32 %s190, 2
      $region24: #{tpu_custom_call.1} parent=19 // pred_fallthru
        _
      // Predicated region
      $region25: #{tpu_custom_call.1} parent=19 // pred_check
        %p192 = pneg %p82
      $region26: #{tpu_custom_call.1} parent=19 // pred_check_branch
        %194 = sbr.rel (%p192) target = $region28
      $region27: #{tpu_custom_call.1} parent=19 // pred_region
        %s195 = sadd.s32 %s18, 1
        %s196 = smul.u32 %s195, 8
        %p197 = scmp.lt.s32.totalorder %s16, 1
        %s198 = scalar_select %p197, %s16, 1
        %p199 = scmp.lt.s32.totalorder %s196, 8
        %s200 = scalar_select %p199, %s196, 8
        %s201 = smul.addr %s200, 2
        %s202 = smul.addr %s198, 18
        %s203 = sadd.s32 %s201, %s202
        %s204 = smul.addr %s203, 8
        %s205 = scalar_lea.vmem %s1, %s204
        %s206 = sadd.s32 %s18, 1
        %s207 = smul.u32 %s206, 8
      $region28: #{tpu_custom_call.1} parent=19 // pred_fallthru
        _
    $region20: #{tpu_custom_call.1} parent=5 // pred_fallthru
      _
    %p208 = scmp.le.s32.totalorder 1, %s9
    %p209 = scmp.lt.s32.totalorder %s9, 3
    %p210 = pnand %p208, %p209
    %p211 = pneg %p210
    // Predicated region
    $region29: #{tpu_custom_call.1} parent=5 // pred_check
      _
    $region30: #{tpu_custom_call.1} parent=5 // pred_check_branch
      %213 = sbr.rel (%p210) target = $region32
    $region31: #{tpu_custom_call.1} parent=5 // pred_region
      %s214 = ssub.s32 %s9, 1
      %s215 = smul.u32 8, %s21
      %s216 = ssub.s32 9, %s215
      %p217 = scmp.lt.s32.totalorder %s216, 8
      %s218 = scalar_select %p217, %s216, 8
      %s219 = smul.u32 8, %s218
      %s220 = smul.u32 %s219, 2
      %p221 = scmp.lt.s32.totalorder %s19, 1
      %s222 = scalar_select %p221, %s19, 1
      %p223 = scmp.lt.s32.totalorder %s215, 8
      %s224 = scalar_select %p223, %s215, 8
      %s225 = smul.addr %s224, 2
      %s226 = smul.addr %s222, 18
      %s227 = sadd.s32 %s225, %s226
      %s228 = smul.addr %s227, 8
      %s229 = scalar_lea.vmem %s0, %s228
      %p230 = pneg %p56
      %p231 = pneg %p53
      %s232 = sadd.s32 %s21, 1
      %s233 = smul.u32 %s232, 8
      %p234 = scmp.lt.s32.totalorder %s19, 1
      %s235 = scalar_select %p234, %s19, 1
      %p236 = scmp.lt.s32.totalorder %s233, 8
      %s237 = scalar_select %p236, %s233, 8
      %s238 = smul.addr %s237, 2
      %s239 = smul.addr %s235, 18
      %s240 = sadd.s32 %s238, %s239
      %s241 = smul.addr %s240, 8
      %s242 = scalar_lea.vmem %s1, %s241
      %p243 = pneg %p88
      %p244 = pneg %p85
      %p245 = scmp.lt.s32.totalorder %s20, 0
      %s246 = scalar_select %p245, %s20, 0
      %s247 = smul.addr %s246, 8
      %s248 = scalar_lea.vmem %s2, %s247
      %p249 = pneg %p114
      %p250 = pneg %p111
      %p251 = pneg %p142
      %p252 = pneg %p139
      %p253 = scmp.lt.s32.totalorder %s19, 1
      %s254 = scalar_select %p253, %s19, 1
      %p255 = scmp.lt.s32.totalorder %s20, 0
      %s256 = scalar_select %p255, %s20, 0
      %s257 = smul.addr %s254, 8
      %s258 = sadd.s32 %s256, %s257
      %s259 = smul.addr %s258, 8
      %s260 = scalar_lea.vmem %s3, %s259
      %s261 = smul.u32 8, %s21
      %s262 = ssub.s32 9, %s261
      %p263 = scmp.lt.s32.totalorder %s262, 8
      %s264 = scalar_select %p263, %s262, 8
      %s265 = smul.u32 8, %s264
      %s266 = smul.u32 %s265, 2
      %p267 = scmp.lt.s32.totalorder %s19, 1
      %s268 = scalar_select %p267, %s19, 1
      %p269 = scmp.lt.s32.totalorder %s261, 8
      %s270 = scalar_select %p269, %s261, 8
      %s271 = smul.addr %s270, 2
      %s272 = smul.addr %s268, 18
      %s273 = sadd.s32 %s271, %s272
      %s274 = smul.addr %s273, 8
      %s275 = scalar_lea.vmem %s0, %s274
      %s276 = smul.u32 8, %s21
      %s277 = ssub.s32 9, %s276
      %p278 = scmp.lt.s32.totalorder %s277, 8
      %s279 = scalar_select %p278, %s277, 8
      %s280 = smul.u32 8, %s279
      %s281 = smul.u32 %s280, 2
      %s282 = sadd.s32 %s21, 1
      %s283 = smul.u32 %s282, 8
      %p284 = scmp.lt.s32.totalorder %s19, 1
      %s285 = scalar_select %p284, %s19, 1
      %p286 = scmp.lt.s32.totalorder %s283, 8
      %s287 = scalar_select %p286, %s283, 8
      %s288 = smul.addr %s287, 2
      %s289 = smul.addr %s285, 18
      %s290 = sadd.s32 %s288, %s289
      %s291 = smul.addr %s290, 8
      %s292 = scalar_lea.vmem %s1, %s291
      %s293 = sadd.s32 %s21, 1
      %s294 = smul.u32 %s293, 8
      %p295 = scmp.lt.s32.totalorder %s20, 0
      %s296 = scalar_select %p295, %s20, 0
      %s297 = smul.addr %s296, 8
      %s298 = scalar_lea.vmem %s2, %s297
      %p299 = scmp.lt.s32.totalorder %s19, 1
      %s300 = scalar_select %p299, %s19, 1
      %p301 = scmp.lt.s32.totalorder %s20, 0
      %s302 = scalar_select %p301, %s20, 0
      %s303 = smul.addr %s300, 8
      %s304 = sadd.s32 %s302, %s303
      %s305 = smul.addr %s304, 8
      %s306 = scalar_lea.vmem %s3, %s305
      %v307 = vld [vmem:[%s275] sm:$0xff]
      %v308 = vld [vmem:[%s275 + $0x8] sm:$0x1]
      %v309 = vld [vmem:[%s275 + $0x10] sm:$0xff]
      %v310 = vld [vmem:[%s275 + $0x18] sm:$0x1]
      %v311 = vld [vmem:[%s275 + $0x20] sm:$0xff]
      %v312 = vld [vmem:[%s275 + $0x28] sm:$0x1]
      %v313 = vld [vmem:[%s275 + $0x30] sm:$0xff]
      %v314 = vld [vmem:[%s275 + $0x38] sm:$0x1]
      %v315 = vld [vmem:[%s275 + $0x40] sm:$0xff]
      %v316 = vld [vmem:[%s275 + $0x48] sm:$0x1]
      %v317 = vld [vmem:[%s275 + $0x50] sm:$0xff]
      %v318 = vld [vmem:[%s275 + $0x58] sm:$0x1]
      %v319 = vld [vmem:[%s275 + $0x60] sm:$0xff]
      %v320 = vld [vmem:[%s275 + $0x68] sm:$0x1]
      %v321 = vld [vmem:[%s275 + $0x70] sm:$0xff]
      %v322 = vld [vmem:[%s275 + $0x78] sm:$0x1]
      %v323 = vld [vmem:[%s292] sm:$0xff]
      %v324 = vld [vmem:[%s292 + $0x8] sm:$0x1]
      %vm325 = vcmask 130048
      %326 = vst.msk [vmem:[#allocation5] sm:$0xff] %vm325, %v307
      %327 = vst.msk [vmem:[#allocation5 + $0x8] sm:$0xff] %vm325, %v309
      %328 = vst.msk [vmem:[#allocation5 + $0x10] sm:$0xff] %vm325, %v311
      %329 = vst.msk [vmem:[#allocation5 + $0x18] sm:$0xff] %vm325, %v313
      %330 = vst.msk [vmem:[#allocation5 + $0x20] sm:$0xff] %vm325, %v315
      %331 = vst.msk [vmem:[#allocation5 + $0x28] sm:$0xff] %vm325, %v317
      %332 = vst.msk [vmem:[#allocation5 + $0x30] sm:$0xff] %vm325, %v319
      %333 = vst.msk [vmem:[#allocation5 + $0x38] sm:$0xff] %vm325, %v321
      %vm350 = vcmask 1046528
      %v351 = vrot.slane %v307, 1
      %v352 = vrot.slane %v308, 1
      %v353 = vsel %vm350, %v351, %v352
      %v354 = vrot.slane %v309, 1
      %v355 = vrot.slane %v310, 1
      %v356 = vsel %vm350, %v354, %v355
      %v357 = vrot.slane %v311, 1
      %v358 = vrot.slane %v312, 1
      %v359 = vsel %vm350, %v357, %v358
      %v360 = vrot.slane %v313, 1
      %v361 = vrot.slane %v314, 1
      %v362 = vsel %vm350, %v360, %v361
      %v363 = vrot.slane %v315, 1
      %v364 = vrot.slane %v316, 1
      %v365 = vsel %vm350, %v363, %v364
      %v366 = vrot.slane %v317, 1
      %v367 = vrot.slane %v318, 1
      %v368 = vsel %vm350, %v366, %v367
      %v369 = vrot.slane %v319, 1
      %v370 = vrot.slane %v320, 1
      %v371 = vsel %vm350, %v369, %v370
      %v372 = vrot.slane %v321, 1
      %v373 = vrot.slane %v322, 1
      %v374 = vsel %vm350, %v372, %v373
      %375 = vrot.lane.b32.xlu0 %v353, 16
      %v376 = vpop.permute.xlu0 %375
      %377 = vrot.lane.b32.xlu0 %v356, 16
      %v378 = vpop.permute.xlu0 %377
      %379 = vrot.lane.b32.xlu0 %v359, 16
      %v380 = vpop.permute.xlu0 %379
      %381 = vrot.lane.b32.xlu0 %v362, 16
      %v382 = vpop.permute.xlu0 %381
      %383 = vrot.lane.b32.xlu0 %v365, 16
      %v384 = vpop.permute.xlu0 %383
      %385 = vrot.lane.b32.xlu0 %v368, 16
      %v386 = vpop.permute.xlu0 %385
      %387 = vrot.lane.b32.xlu0 %v371, 16
      %v388 = vpop.permute.xlu0 %387
      %389 = vrot.lane.b32.xlu0 %v374, 16
      %v390 = vpop.permute.xlu0 %389
      %vm399 = vcmask 261248
      %400 = vst.msk [vmem:[#allocation5] sm:$0xff] %vm399, %v376
      %401 = vst.msk [vmem:[#allocation5 + $0x8] sm:$0xff] %vm399, %v378
      %402 = vst.msk [vmem:[#allocation5 + $0x10] sm:$0xff] %vm399, %v380
      %403 = vst.msk [vmem:[#allocation5 + $0x18] sm:$0xff] %vm399, %v382
      %404 = vst.msk [vmem:[#allocation5 + $0x20] sm:$0xff] %vm399, %v384
      %405 = vst.msk [vmem:[#allocation5 + $0x28] sm:$0xff] %vm399, %v386
      %406 = vst.msk [vmem:[#allocation5 + $0x30] sm:$0xff] %vm399, %v388
      %407 = vst.msk [vmem:[#allocation5 + $0x38] sm:$0xff] %vm399, %v390
      %409 = vrot.lane.b32.xlu0 %v309, 32
      %v410 = vpop.permute.xlu0 %409
      %411 = vrot.lane.b32.xlu0 %v311, 32
      %v412 = vpop.permute.xlu0 %411
      %413 = vrot.lane.b32.xlu0 %v313, 32
      %v414 = vpop.permute.xlu0 %413
      %415 = vrot.lane.b32.xlu0 %v315, 32
      %v416 = vpop.permute.xlu0 %415
      %417 = vrot.lane.b32.xlu0 %v317, 32
      %v418 = vpop.permute.xlu0 %417
      %419 = vrot.lane.b32.xlu0 %v319, 32
      %v420 = vpop.permute.xlu0 %419
      %421 = vrot.lane.b32.xlu0 %v321, 32
      %v422 = vpop.permute.xlu0 %421
      %423 = vrot.lane.b32.xlu0 %v323, 32
      %v424 = vpop.permute.xlu0 %423
      %vm433 = vcmask 392448
      %434 = vst.msk [vmem:[#allocation5] sm:$0xff] %vm433, %v410
      %435 = vst.msk [vmem:[#allocation5 + $0x8] sm:$0xff] %vm433, %v412
      %436 = vst.msk [vmem:[#allocation5 + $0x10] sm:$0xff] %vm433, %v414
      %437 = vst.msk [vmem:[#allocation5 + $0x18] sm:$0xff] %vm433, %v416
      %438 = vst.msk [vmem:[#allocation5 + $0x20] sm:$0xff] %vm433, %v418
      %439 = vst.msk [vmem:[#allocation5 + $0x28] sm:$0xff] %vm433, %v420
      %440 = vst.msk [vmem:[#allocation5 + $0x30] sm:$0xff] %vm433, %v422
      %441 = vst.msk [vmem:[#allocation5 + $0x38] sm:$0xff] %vm433, %v424
      %v443 = vrot.slane %v323, 1
      %v444 = vrot.slane %v324, 1
      %v445 = vsel %vm350, %v443, %v444
      %446 = vrot.lane.b32.xlu0 %v356, 48
      %v447 = vpop.permute.xlu0 %446
      %448 = vrot.lane.b32.xlu0 %v359, 48
      %v449 = vpop.permute.xlu0 %448
      %450 = vrot.lane.b32.xlu0 %v362, 48
      %v451 = vpop.permute.xlu0 %450
      %452 = vrot.lane.b32.xlu0 %v365, 48
      %v453 = vpop.permute.xlu0 %452
      %454 = vrot.lane.b32.xlu0 %v368, 48
      %v455 = vpop.permute.xlu0 %454
      %456 = vrot.lane.b32.xlu0 %v371, 48
      %v457 = vpop.permute.xlu0 %456
      %458 = vrot.lane.b32.xlu0 %v374, 48
      %v459 = vpop.permute.xlu0 %458
      %460 = vrot.lane.b32.xlu0 %v445, 48
      %v461 = vpop.permute.xlu0 %460
      %vm470 = vcmask 523648
      %471 = vst.msk [vmem:[#allocation5] sm:$0xff] %vm470, %v447
      %472 = vst.msk [vmem:[#allocation5 + $0x8] sm:$0xff] %vm470, %v449
      %473 = vst.msk [vmem:[#allocation5 + $0x10] sm:$0xff] %vm470, %v451
      %474 = vst.msk [vmem:[#allocation5 + $0x18] sm:$0xff] %vm470, %v453
      %475 = vst.msk [vmem:[#allocation5 + $0x20] sm:$0xff] %vm470, %v455
      %476 = vst.msk [vmem:[#allocation5 + $0x28] sm:$0xff] %vm470, %v457
      %477 = vst.msk [vmem:[#allocation5 + $0x30] sm:$0xff] %vm470, %v459
      %478 = vst.msk [vmem:[#allocation5 + $0x38] sm:$0xff] %vm470, %v461
      %v479 = vld [vmem:[#allocation5] sm:$0xff]
      %v480 = vld [vmem:[#allocation5 + $0x8] sm:$0xff]
      %v481 = vld [vmem:[#allocation5 + $0x10] sm:$0xff]
      %v482 = vld [vmem:[#allocation5 + $0x18] sm:$0xff]
      %v483 = vld [vmem:[#allocation5 + $0x20] sm:$0xff]
      %v484 = vld [vmem:[#allocation5 + $0x28] sm:$0xff]
      %v485 = vld [vmem:[#allocation5 + $0x30] sm:$0xff]
      %v486 = vld [vmem:[#allocation5 + $0x38] sm:$0xff]
      %v487 = vld [vmem:[%s298] sm:$0xff]
      %v488 = vld [vmem:[%s298 + $0x8] sm:$0xff]
      %v489 = vld [vmem:[%s298 + $0x10] sm:$0xff]
      %v490 = vld [vmem:[%s298 + $0x18] sm:$0xff]
      %v491 = vld [vmem:[%s298 + $0x20] sm:$0xff]
      %v492 = vld [vmem:[%s298 + $0x28] sm:$0xff]
      %v493 = vld [vmem:[%s298 + $0x30] sm:$0xff]
      %v494 = vld [vmem:[%s298 + $0x38] sm:$0xff]
      %vm495 = vcmask 523264
      %v497 = vsel %vm495, %v479, 0
      %v500 = vsel %vm495, %v480, 0
      %v503 = vsel %vm495, %v481, 0
      %v506 = vsel %vm495, %v482, 0
      %v509 = vsel %vm495, %v483, 0
      %v512 = vsel %vm495, %v484, 0
      %v515 = vsel %vm495, %v485, 0
      %v518 = vsel %vm495, %v486, 0
      %520 = vmatpush.msra.mxu0 0.0
      %521 = vmatpush.msra.mxu0 0.0
      %522 = vmatpush.msra.mxu0 0.0
      %523 = vmatpush.msra.mxu0 0.0
      %524 = vmatpush.msra.mxu0 0.0
      %525 = vmatpush.msra.mxu0 0.0
      %526 = vmatpush.msra.mxu0 0.0
      %527 = vmatpush.msra.mxu0 0.0
      %528 = vmatpush.msra.mxu0 %v494
      %529 = vmatpush.msra.mxu0 %v493
      %530 = vmatpush.msra.mxu0 %v492
      %531 = vmatpush.msra.mxu0 %v491
      %532 = vmatpush.msra.mxu0 %v490
      %533 = vmatpush.msra.mxu0 %v489
      %534 = vmatpush.msra.mxu0 %v488
      %535 = vmatpush.msra.mxu0 %v487
      %536 = vmatmul.f32.gmra.mxu0 %v497
      %v537 = vpop.f32.mrf.mxu0
      %v538 = vadd.f32 0.0, %v537
      %539 = vmatmul.f32.gmra.mxu0 %v500
      %v540 = vpop.f32.mrf.mxu0
      %v541 = vadd.f32 0.0, %v540
      %542 = vmatmul.f32.gmra.mxu0 %v503
      %v543 = vpop.f32.mrf.mxu0
      %v544 = vadd.f32 0.0, %v543
      %545 = vmatmul.f32.gmra.mxu0 %v506
      %v546 = vpop.f32.mrf.mxu0
      %v547 = vadd.f32 0.0, %v546
      %548 = vmatmul.f32.gmra.mxu0 %v509
      %v549 = vpop.f32.mrf.mxu0
      %v550 = vadd.f32 0.0, %v549
      %551 = vmatmul.f32.gmra.mxu0 %v512
      %v552 = vpop.f32.mrf.mxu0
      %v553 = vadd.f32 0.0, %v552
      %554 = vmatmul.f32.gmra.mxu0 %v515
      %v555 = vpop.f32.mrf.mxu0
      %v556 = vadd.f32 0.0, %v555
      %557 = vmatmul.f32.gmra.mxu0 %v518
      %v558 = vpop.f32.mrf.mxu0
      %v559 = vadd.f32 0.0, %v558
      %560 = vdwg.mxu0
      %p561 = scmp.eq.s32.totalorder %s21, 0
      // Predicated region
      $region33: #{tpu_custom_call.1} parent=31 // pred_check
        %p562 = pneg %p561
      $region34: #{tpu_custom_call.1} parent=31 // pred_check_branch
        %564 = sbr.rel (%p562) target = $region36
      $region35: #{tpu_custom_call.1} parent=31 // pred_region
        %565 = vst [vmem:[#allocation3] sm:$0x1] 0.0
        %566 = vst [vmem:[#allocation4] sm:$0x1] 0.0
      $region36: #{tpu_custom_call.1} parent=31 // pred_fallthru
        _
      %v567 = vld [vmem:[#allocation3] sm:$0x1]
      %v568 = vadd.f32 %v538, %v541
      %v569 = vadd.f32 %v568, %v544
      %v570 = vadd.f32 %v569, %v547
      %v571 = vadd.f32 %v570, %v550
      %v572 = vadd.f32 %v571, %v553
      %v573 = vadd.f32 %v572, %v556
      %v574 = vadd.f32 %v573, %v559
      %v575 = vrot.slane %v574, 4
      %v576 = vadd.f32 %v574, %v575
      %v577 = vrot.slane %v576, 2
      %v578 = vadd.f32 %v576, %v577
      %v579 = vrot.slane %v578, 1
      %v580 = vadd.f32 %v578, %v579
      %v581 = vadd.f32 %v567, %v580
      %582 = vst [vmem:[#allocation3] sm:$0x1] %v581
      %v583 = vld [vmem:[#allocation4] sm:$0x1]
      %v584 = vmul.f32 %v538, %v538
      %v585 = vmul.f32 %v541, %v541
      %v586 = vmul.f32 %v544, %v544
      %v587 = vmul.f32 %v547, %v547
      %v588 = vmul.f32 %v550, %v550
      %v589 = vmul.f32 %v553, %v553
      %v590 = vmul.f32 %v556, %v556
      %v591 = vmul.f32 %v559, %v559
      %v592 = vadd.f32 %v584, %v585
      %v593 = vadd.f32 %v592, %v586
      %v594 = vadd.f32 %v593, %v587
      %v595 = vadd.f32 %v594, %v588
      %v596 = vadd.f32 %v595, %v589
      %v597 = vadd.f32 %v596, %v590
      %v598 = vadd.f32 %v597, %v591
      %v599 = vrot.slane %v598, 4
      %v600 = vadd.f32 %v598, %v599
      %v601 = vrot.slane %v600, 2
      %v602 = vadd.f32 %v600, %v601
      %v603 = vrot.slane %v602, 1
      %v604 = vadd.f32 %v602, %v603
      %v605 = vadd.f32 %v583, %v604
      %606 = vst [vmem:[#allocation4] sm:$0x1] %v605
      %s607 = smul.u32 %s21, 64
      %s608 = scalar_lea.vmem [#allocation2], %s607
      %609 = vst [vmem:[%s608] sm:$0xff] %v538
      %610 = vst [vmem:[%s608 + $0x8] sm:$0xff] %v541
      %611 = vst [vmem:[%s608 + $0x10] sm:$0xff] %v544
      %612 = vst [vmem:[%s608 + $0x18] sm:$0xff] %v547
      %613 = vst [vmem:[%s608 + $0x20] sm:$0xff] %v550
      %614 = vst [vmem:[%s608 + $0x28] sm:$0xff] %v553
      %615 = vst [vmem:[%s608 + $0x30] sm:$0xff] %v556
      %616 = vst [vmem:[%s608 + $0x38] sm:$0xff] %v559
      // Predicated region
      $region37: #{tpu_custom_call.1} parent=31 // pred_check
        %p617 = pneg %p561
      $region38: #{tpu_custom_call.1} parent=31 // pred_check_branch
        %619 = sbr.rel (%p617) target = $region40
      $region39: #{tpu_custom_call.1} parent=31 // pred_region
        %v620 = vld [vmem:[#allocation3] sm:$0x1]
        %v621 = vmul.f32 %v620, 0.015625
        %v622 = vld [vmem:[#allocation4] sm:$0x1]
        %v623 = vmul.f32 %v622, 0.015625
        %v624 = vmul.f32 %v621, %v621
        %v625 = vsub.f32 %v623, %v624
        %v626 = vmax.f32 %v625, 0.0
        %v627 = vadd.f32 %v626, 1e-05
        %v628 = vrsqrt.pop %v627
        %v629 = vmul.f32 %v628, %v627
        %v630 = vmul.f32 %v629, %v628
        %v631 = vmul.f32 0.5, %v630
        %v632 = vsub.f32 1.5, %v631
        %v633 = vmul.f32 %v628, %v632
        %vm634 = vweird.f32 %v627
        %vm635 = vweird.f32 %v628
        %vm636 = vmor %vm634, %vm635
        %v637 = vsel %vm636, %v628, %v633
        %v638 = vld [vmem:[#allocation2] sm:$0xff]
        %v639 = vld [vmem:[#allocation2 + $0x8] sm:$0xff]
        %v640 = vld [vmem:[#allocation2 + $0x10] sm:$0xff]
        %v641 = vld [vmem:[#allocation2 + $0x18] sm:$0xff]
        %v642 = vld [vmem:[#allocation2 + $0x20] sm:$0xff]
        %v643 = vld [vmem:[#allocation2 + $0x28] sm:$0xff]
        %v644 = vld [vmem:[#allocation2 + $0x30] sm:$0xff]
        %v645 = vld [vmem:[#allocation2 + $0x38] sm:$0xff]
        %v647 = vperm.slane %v621, 0
        %v649 = vsub.f32 %v638, %v647
        %v650 = vsub.f32 %v639, %v647
        %v651 = vsub.f32 %v640, %v647
        %v652 = vsub.f32 %v641, %v647
        %v653 = vsub.f32 %v642, %v647
        %v654 = vsub.f32 %v643, %v647
        %v655 = vsub.f32 %v644, %v647
        %v656 = vsub.f32 %v645, %v647
        %v658 = vperm.slane %v637, 0
        %v660 = vmul.f32 %v649, %v658
        %v661 = vmul.f32 %v650, %v658
        %v662 = vmul.f32 %v651, %v658
        %v663 = vmul.f32 %v652, %v658
        %v664 = vmul.f32 %v653, %v658
        %v665 = vmul.f32 %v654, %v658
        %v666 = vmul.f32 %v655, %v658
        %v667 = vmul.f32 %v656, %v658
        %vm668 = vcmp.ge.f32.partialorder %v660, 0.0
        %vm669 = vcmp.ge.f32.partialorder %v661, 0.0
        %vm670 = vcmp.ge.f32.partialorder %v662, 0.0
        %vm671 = vcmp.ge.f32.partialorder %v663, 0.0
        %vm672 = vcmp.ge.f32.partialorder %v664, 0.0
        %vm673 = vcmp.ge.f32.partialorder %v665, 0.0
        %vm674 = vcmp.ge.f32.partialorder %v666, 0.0
        %vm675 = vcmp.ge.f32.partialorder %v667, 0.0
        %v676 = vmul.f32 %v660, 0.2
        %v677 = vmul.f32 %v661, 0.2
        %v678 = vmul.f32 %v662, 0.2
        %v679 = vmul.f32 %v663, 0.2
        %v680 = vmul.f32 %v664, 0.2
        %v681 = vmul.f32 %v665, 0.2
        %v682 = vmul.f32 %v666, 0.2
        %v683 = vmul.f32 %v667, 0.2
        %v684 = vsel %vm668, %v660, %v676
        %v685 = vsel %vm669, %v661, %v677
        %v686 = vsel %vm670, %v662, %v678
        %v687 = vsel %vm671, %v663, %v679
        %v688 = vsel %vm672, %v664, %v680
        %v689 = vsel %vm673, %v665, %v681
        %v690 = vsel %vm674, %v666, %v682
        %v691 = vsel %vm675, %v667, %v683
        %vm692 = vcmask 64512
        %693 = vst.msk [vmem:[%s306] sm:$0xff] %vm692, %v684
        %694 = vst.msk [vmem:[%s306 + $0x8] sm:$0xff] %vm692, %v685
        %695 = vst.msk [vmem:[%s306 + $0x10] sm:$0xff] %vm692, %v686
        %696 = vst.msk [vmem:[%s306 + $0x18] sm:$0xff] %vm692, %v687
        %697 = vst.msk [vmem:[%s306 + $0x20] sm:$0xff] %vm692, %v688
        %698 = vst.msk [vmem:[%s306 + $0x28] sm:$0xff] %vm692, %v689
        %699 = vst.msk [vmem:[%s306 + $0x30] sm:$0xff] %vm692, %v690
        %700 = vst.msk [vmem:[%s306 + $0x38] sm:$0xff] %vm692, %v691
      $region40: #{tpu_custom_call.1} parent=31 // pred_fallthru
        _
      %p701 = scmp.lt.s32.totalorder %s19, 1
      %s702 = scalar_select %p701, %s19, 1
      %p703 = scmp.lt.s32.totalorder %s20, 0
      %s704 = scalar_select %p703, %s20, 0
      %s705 = smul.addr %s702, 8
      %s706 = sadd.s32 %s704, %s705
      %s707 = smul.addr %s706, 8
      %s708 = scalar_lea.vmem %s3, %s707
      // Predicated region
      $region41: #{tpu_custom_call.1} parent=31 // pred_check
        %p709 = pneg %p139
      $region42: #{tpu_custom_call.1} parent=31 // pred_check_branch
        %711 = sbr.rel (%p709) target = $region44
      $region43: #{tpu_custom_call.1} parent=31 // pred_region
        _
      $region44: #{tpu_custom_call.1} parent=31 // pred_fallthru
        _
    $region32: #{tpu_custom_call.1} parent=5 // pred_fallthru
      _
    %p712 = scmp.le.s32.totalorder 2, %s9
    // Predicated region
    $region45: #{tpu_custom_call.1} parent=5 // pred_check
      %p713 = pneg %p712
    $region46: #{tpu_custom_call.1} parent=5 // pred_check_branch
      %715 = sbr.rel (%p713) target = $region48
    $region47: #{tpu_custom_call.1} parent=5 // pred_region
      %s716 = ssub.s32 %s9, 2
      // Predicated region
      $region49: #{tpu_custom_call.1} parent=47 // pred_check
        %p717 = pneg %p145
      $region50: #{tpu_custom_call.1} parent=47 // pred_check_branch
        %719 = sbr.rel (%p717) target = $region52
      $region51: #{tpu_custom_call.1} parent=47 // pred_region
        %p720 = scmp.lt.s32.totalorder %s22, 1
        %s721 = scalar_select %p720, %s22, 1
        %p722 = scmp.lt.s32.totalorder %s23, 0
        %s723 = scalar_select %p722, %s23, 0
        %s724 = smul.addr %s721, 8
        %s725 = sadd.s32 %s723, %s724
        %s726 = smul.addr %s725, 8
        %s727 = scalar_lea.vmem %s3, %s726
      $region52: #{tpu_custom_call.1} parent=47 // pred_fallthru
        _
    $region48: #{tpu_custom_call.1} parent=5 // pred_fallthru
      _
  $region6: #{tpu_custom_call.1} parent=0 // loop_footer
    %s13 = sadd.s32 1, %s9
  $region7: #{tpu_custom_call.1} parent=0 // loop_footer_branch
    %8 = sbr.rel target = $region3
  $region8: #{tpu_custom_call.1} parent=0 // loop_exit
    _

</llo_original>
